<compile_context>
chip_gen: v7x
topology: tpu7x:2x2x1
jax: 0.10.0
libtpu: 0.0.40
codegen_flags: <defaults>
</compile_context>

<pallas_src>
import jax
import jax.numpy as jnp
from jax.experimental import pallas as pl
from jax.experimental.pallas import tpu as pltpu

# ----------------------------- configuration -------------------------------
EPSILON = 1.0          # poly loss epsilon
SMOOTH = 1e-5          # soft-dice smooth
WEIGHT_DICE = 1.0
WEIGHT_POLY = 1.0      # weight_poly1_ce
LANES = 128            # TPU lane width


# ------------------------------- wrapper ------------------------------------
def dc_and_poly1ce_loss(net_output, target):
    """net_output: (N, C, H, W) float logits (f32 or bf16); target: (N, 1, H, W) ids."""
    N, C, H, W = net_output.shape
    HW = H * W
    assert HW % LANES == 0, "H*W must be a multiple of 128 (no padding/mask path)"
    R = HW // LANES

    # --- tile selection: prefer large tiles (long DMA bursts, fewer grid steps) ---
    if net_output.dtype == jnp.bfloat16:
        candidates = (512, 256, 128, 64, 32, 16)     # bf16 needs 16-row alignment
    else:
        candidates = (512, 256, 128, 64, 32, 16, 8)
    tile_r = R                                        # fallback: whole image, one block
    for cand in candidates:
        if R % cand == 0:
            tile_r = cand
            break
    # TODO(synk): the tile_r == R fallback (R not divisible by 8) loads one giant block
    # per batch item; fine for these shapes, add masked cdiv tiling for huge odd H*W.

    steps = R // tile_r
    # v7x: when N == 1 split the pixel axis across a 2nd "parallel" grid axis so the
    # second TensorCore gets work.  Each split writes its own partial-output row.
    S = 2 if (N == 1 and steps % 2 == 0) else 1
    steps_per_split = steps // S

    # in-kernel chunking: 8-sublane chunks keep the softmax chain in vregs
    chunk_rows = 8 if (tile_r >= 8 and tile_r % 8 == 0) else tile_r
    n_chunks = tile_r // chunk_rows
    unroll = n_chunks if n_chunks <= 8 else 8

    # ------------------------------- kernel ---------------------------------
    def kernel(logits_ref, lab_ref, tp_out, ps_out, ys_out, poly_out,
               tp_acc, ps_acc, ys_acc, poly_acc):
        r = pl.program_id(2)

        @pl.when(r == 0)
        def _init():
            tp_acc[...] = jnp.zeros_like(tp_acc)
            ps_acc[...] = jnp.zeros_like(ps_acc)
            ys_acc[...] = jnp.zeros_like(ys_acc)
            poly_acc[...] = jnp.zeros_like(poly_acc)

        def process(x_raw, lab, carry):
            # x_raw: (C, ch, 128) logits chunk, lab: (ch, 128) int32 labels chunk
            tp_c, ps_c, ys_c, poly_c = carry
            x = x_raw.astype(jnp.float32)
            cls = jax.lax.broadcasted_iota(jnp.int32, x.shape, 0)      # C small planes
            y_oh = (cls == lab[None, :, :]).astype(jnp.float32)        # one-hot

            # softmax over channels (channel = plane axis -> pure VPU combines)
            m = jnp.max(x, axis=0)                                     # (ch, 128)
            e = jnp.exp(x - m[None])                                   # (C, ch, 128)
            sum_e = jnp.sum(e, axis=0)                                 # (ch, 128)
            r0 = pl.reciprocal(sum_e, approx=True)                     # EUP slot
            inv = r0 * (2.0 - sum_e * r0)                              # Newton -> ~1e-7
            sm = e * inv[None]                                         # (C, ch, 128)

            tp_t = sm * y_oh
            x_true = jnp.sum(x * y_oh, axis=0)                         # logit of true cls
            pt = jnp.sum(tp_t, axis=0)                                 # softmax prob of t
            ce = jnp.log(sum_e) + (m - x_true)                         # -log softmax_t
            return (tp_c + tp_t, ps_c + sm, ys_c + y_oh,
                    poly_c + (ce + EPSILON * (1.0 - pt)))

        zc = jnp.zeros((C, chunk_rows, LANES), jnp.float32)
        zp = jnp.zeros((chunk_rows, LANES), jnp.float32)
        carry0 = (zc, zc, zc, zp)

        if n_chunks == 1:
            carry = process(logits_ref[0], lab_ref[0, 0], carry0)
        else:
            def body(i, carry):
                off = pl.multiple_of(i * chunk_rows, chunk_rows)       # 8-aligned
                x = logits_ref[0, :, pl.ds(off, chunk_rows), :]
                lab = lab_ref[0, 0, pl.ds(off, chunk_rows), :]
                return process(x, lab, carry)
            carry = jax.lax.fori_loop(0, n_chunks, body, carry0, unroll=unroll)

        # single small (C, 8, 128) read-modify-write per grid step
        tp_c, ps_c, ys_c, poly_c = carry
        tp_acc[...] += tp_c
        ps_acc[...] += ps_c
        ys_acc[...] += ys_c
        poly_acc[...] += poly_c

        @pl.when(r == pl.num_programs(2) - 1)
        def _finalize():
            # reduce only the sublane axis -> lane-dense (C, 128) partials
            tp_out[0] = jnp.sum(tp_acc[...], axis=1)
            ps_out[0] = jnp.sum(ps_acc[...], axis=1)
            ys_out[0] = jnp.sum(ys_acc[...], axis=1)
            poly_out[0] = jnp.sum(poly_acc[...], axis=0, keepdims=True)   # (1, 128)

    # ------------------------------- launch ----------------------------------
    # free, contiguous reshapes only — no HBM transpose of the logits
    logits = net_output.reshape(N, C, R, LANES)
    labels = target.astype(jnp.int32).reshape(N, 1, R, LANES)

    in_idx = lambda n, s, r: (n, 0, s * steps_per_split + r, 0)
    cls_out_spec = pl.BlockSpec((1, C, LANES), lambda n, s, r: (n * S + s, 0, 0))
    pix_out_spec = pl.BlockSpec((1, 1, LANES), lambda n, s, r: (n * S + s, 0, 0))

    itemsize = net_output.dtype.itemsize
    cost = pl.CostEstimate(
        flops=int(15 * N * C * HW),
        transcendentals=int(N * HW * (C + 2)),
        bytes_accessed=int(N * C * HW * itemsize + N * HW * 4
                           + (3 * C + 1) * N * S * LANES * 4),
    )

    tp_p, ps_p, ys_p, poly_p = pl.pallas_call(
        kernel,
        out_shape=(
            jax.ShapeDtypeStruct((N * S, C, LANES), jnp.float32),   # tp lane-partials
            jax.ShapeDtypeStruct((N * S, C, LANES), jnp.float32),   # sum(softmax)
            jax.ShapeDtypeStruct((N * S, C, LANES), jnp.float32),   # sum(one-hot)
            jax.ShapeDtypeStruct((N * S, 1, LANES), jnp.float32),   # poly1-CE sum
        ),
        grid_spec=pltpu.PrefetchScalarGridSpec(
            num_scalar_prefetch=0,
            grid=(N, S, steps_per_split),
            in_specs=[
                pl.BlockSpec((1, C, tile_r, LANES), in_idx),
                pl.BlockSpec((1, 1, tile_r, LANES), in_idx),
            ],
            out_specs=(cls_out_spec, cls_out_spec, cls_out_spec, pix_out_spec),
            scratch_shapes=[
                pltpu.VMEM((C, chunk_rows, LANES), jnp.float32),    # tp accumulator
                pltpu.VMEM((C, chunk_rows, LANES), jnp.float32),    # softmax-sum acc
                pltpu.VMEM((C, chunk_rows, LANES), jnp.float32),    # one-hot-sum acc
                pltpu.VMEM((chunk_rows, LANES), jnp.float32),       # poly1 acc
            ],
        ),
        compiler_params=pltpu.CompilerParams(
            dimension_semantics=("parallel", "parallel", "arbitrary")),
        cost_estimate=cost,
    )(logits, labels)

    # ---- tiny finalize in plain JAX (a few dozen scalars) ----
    tp = jnp.sum(tp_p, axis=(0, 2))                 # (C,)  batch_dice=True
    ps = jnp.sum(ps_p, axis=(0, 2))
    ys = jnp.sum(ys_p, axis=(0, 2))
    fp = ps - tp
    fn = ys - tp
    dc = (2.0 * tp + SMOOTH) / (2.0 * tp + fp + fn + SMOOTH + 1e-8)
    dc_loss = -jnp.mean(dc[1:])                     # do_bg=False
    poly_mean = jnp.sum(poly_p) / jnp.float32(N * HW)   # reduction='mean'
    return WEIGHT_POLY * poly_mean + WEIGHT_DICE * dc_loss


# --------------------------- pure-JAX reference ------------------------------
def _reference(net_output, target):
    x = net_output.astype(jnp.float32)
    y_oh = (jax.lax.broadcasted_iota(jnp.int32, x.shape, 1)
            == target.astype(jnp.int32)).astype(jnp.float32)
    sm = jax.nn.softmax(x, axis=1)
    axes = (0, 2, 3)
    tp = jnp.sum(sm * y_oh, axes)
    fp = jnp.sum(sm * (1.0 - y_oh), axes)
    fn = jnp.sum((1.0 - sm) * y_oh, axes)
    dc = (2.0 * tp + SMOOTH) / (2.0 * tp + fp + fn + SMOOTH + 1e-8)
    dc_loss = -jnp.mean(dc[1:])
    logp = jax.nn.log_softmax(x, axis=1)
    ce = -jnp.sum(logp * y_oh, axis=1)              # per-pixel cross entropy
    pt = jnp.sum(sm * y_oh, axis=1)
    poly = jnp.mean(ce + EPSILON * (1.0 - pt))
    return WEIGHT_POLY * poly + WEIGHT_DICE * dc_loss


# --------------------------------- main --------------------------------------
if __name__ == "__main__":
    key = jax.random.PRNGKey(0)
    k1, k2, k3, k4 = jax.random.split(key, 4)

    # Test 1: small shape from the module spec (single-block path, n_chunks == 1).
    N, C, H, W = 2, 4, 16, 16
    x1 = jax.random.normal(k1, (N, C, H, W), dtype=jnp.float32)
    t1 = jax.random.randint(k2, (N, 1, H, W), 0, C, dtype=jnp.int32)
    loss1 = jax.block_until_ready(jax.jit(dc_and_poly1ce_loss)(x1, t1))
    ref1 = jax.block_until_ready(_reference(x1, t1))
    assert jnp.allclose(loss1, ref1, atol=1e-5, rtol=1e-5), (loss1, ref1)

    # Test 2: exercises the chunked fori_loop path, the N==1 2-way core split (S=2)
    # and multi-step reduction accumulation.
    N2, H2, W2 = 1, 512, 512
    x2 = jax.random.normal(k3, (N2, C, H2, W2), dtype=jnp.float32)
    t2 = jax.random.randint(k4, (N2, 1, H2, W2), 0, C, dtype=jnp.int32)
    loss2 = jax.block_until_ready(jax.jit(dc_and_poly1ce_loss)(x2, t2))
    ref2 = jax.block_until_ready(_reference(x2, t2))
    assert jnp.allclose(loss2, ref2, atol=1e-4, rtol=1e-4), (loss2, ref2)

    print("KERNEL_OK")
</pallas_src>

<mosaic_0001>
module attributes {stable_mosaic.version = 11 : i64} {
  func.func @kernel(%arg0: i32, %arg1: i32, %arg2: i32, %arg3: memref<1x4x2x128xf32, #tpu.memory_space<vmem>>, %arg4: memref<1x1x2x128xi32, #tpu.memory_space<vmem>>, %arg5: memref<1x4x128xf32, #tpu.memory_space<vmem>>, %arg6: memref<1x4x128xf32, #tpu.memory_space<vmem>>, %arg7: memref<1x4x128xf32, #tpu.memory_space<vmem>>, %arg8: memref<1x1x128xf32, #tpu.memory_space<vmem>>, %arg9: memref<4x2x128xf32, #tpu.memory_space<vmem>>, %arg10: memref<4x2x128xf32, #tpu.memory_space<vmem>>, %arg11: memref<4x2x128xf32, #tpu.memory_space<vmem>>, %arg12: memref<2x128xf32, #tpu.memory_space<vmem>>) attributes {dimension_semantics = [#tpu.dimension_semantics<parallel>, #tpu.dimension_semantics<parallel>, #tpu.dimension_semantics<arbitrary>], iteration_bounds = array<i64: 2, 1, 1>, scalar_prefetch = 0 : i64, scratch_operands = 4 : i64, tpu.core_type = #tpu.core_type<tc>, window_params = [{transform_indices = @transform_0, window_bounds = array<i64: 1, 4, 2, 128>}, {transform_indices = @transform_1, window_bounds = array<i64: 1, 1, 2, 128>}, {transform_indices = @transform_2, window_bounds = array<i64: 1, 4, 128>}, {transform_indices = @transform_3, window_bounds = array<i64: 1, 4, 128>}, {transform_indices = @transform_4, window_bounds = array<i64: 1, 4, 128>}, {transform_indices = @transform_5, window_bounds = array<i64: 1, 1, 128>}]} {
    %c0_i32 = arith.constant 0 : i32
    %0 = arith.cmpi eq, %arg2, %c0_i32 : i32
    %1 = arith.extui %0 : i1 to i32
    %c0_i32_0 = arith.constant 0 : i32
    %2 = arith.cmpi ne, %1, %c0_i32_0 : i32
    scf.if %2 {
      %cst_40 = arith.constant 0.000000e+00 : f32
      %60 = vector.broadcast %cst_40 : f32 to vector<4x2x128xf32>
      %c0_41 = arith.constant 0 : index
      %c0_42 = arith.constant 0 : index
      %c0_43 = arith.constant 0 : index
      %61 = vector.load %arg9[%c0_41, %c0_42, %c0_43] : memref<4x2x128xf32, #tpu.memory_space<vmem>>, vector<4x2x128xf32>
      tpu.vector_store %arg9[%c0_41, %c0_42, %c0_43], %60 {strides = array<i32>} : memref<4x2x128xf32, #tpu.memory_space<vmem>>, vector<4x2x128xf32>,
      %cst_44 = arith.constant 0.000000e+00 : f32
      %62 = vector.broadcast %cst_44 : f32 to vector<4x2x128xf32>
      %c0_45 = arith.constant 0 : index
      %c0_46 = arith.constant 0 : index
      %c0_47 = arith.constant 0 : index
      %63 = vector.load %arg10[%c0_45, %c0_46, %c0_47] : memref<4x2x128xf32, #tpu.memory_space<vmem>>, vector<4x2x128xf32>
      tpu.vector_store %arg10[%c0_45, %c0_46, %c0_47], %62 {strides = array<i32>} : memref<4x2x128xf32, #tpu.memory_space<vmem>>, vector<4x2x128xf32>,
      %cst_48 = arith.constant 0.000000e+00 : f32
      %64 = vector.broadcast %cst_48 : f32 to vector<4x2x128xf32>
      %c0_49 = arith.constant 0 : index
      %c0_50 = arith.constant 0 : index
      %c0_51 = arith.constant 0 : index
      %65 = vector.load %arg11[%c0_49, %c0_50, %c0_51] : memref<4x2x128xf32, #tpu.memory_space<vmem>>, vector<4x2x128xf32>
      tpu.vector_store %arg11[%c0_49, %c0_50, %c0_51], %64 {strides = array<i32>} : memref<4x2x128xf32, #tpu.memory_space<vmem>>, vector<4x2x128xf32>,
      %cst_52 = arith.constant 0.000000e+00 : f32
      %66 = vector.broadcast %cst_52 : f32 to vector<2x128xf32>
      %c0_53 = arith.constant 0 : index
      %c0_54 = arith.constant 0 : index
      %67 = vector.load %arg12[%c0_53, %c0_54] : memref<2x128xf32, #tpu.memory_space<vmem>>, vector<2x128xf32>
      tpu.vector_store %arg12[%c0_53, %c0_54], %66 {strides = array<i32>} : memref<2x128xf32, #tpu.memory_space<vmem>>, vector<2x128xf32>,
    } else {
    }
    %cst = arith.constant 0.000000e+00 : f32
    %3 = vector.broadcast %cst : f32 to vector<4x2x128xf32>
    %cst_1 = arith.constant 0.000000e+00 : f32
    %4 = vector.broadcast %cst_1 : f32 to vector<2x128xf32>
    %c0 = arith.constant 0 : index
    %c0_2 = arith.constant 0 : index
    %c0_3 = arith.constant 0 : index
    %c0_4 = arith.constant 0 : index
    %5 = vector.load %arg3[%c0, %c0_2, %c0_3, %c0_4] : memref<1x4x2x128xf32, #tpu.memory_space<vmem>>, vector<1x4x2x128xf32>
    %6 = vector.shape_cast %5 : vector<1x4x2x128xf32> to vector<4x2x128xf32>
    %c0_5 = arith.constant 0 : index
    %c0_6 = arith.constant 0 : index
    %c0_7 = arith.constant 0 : index
    %c0_8 = arith.constant 0 : index
    %7 = vector.load %arg4[%c0_5, %c0_6, %c0_7, %c0_8] : memref<1x1x2x128xi32, #tpu.memory_space<vmem>>, vector<1x1x2x128xi32>
    %8 = vector.shape_cast %7 : vector<1x1x2x128xi32> to vector<2x128xi32>
    %9 = tpu.iota {dimensions = array<i32: 0>} : vector<4x2x128xi32>
    %10 = vector.shape_cast %8 : vector<2x128xi32> to vector<1x2x128xi32>
    %11 = vector.broadcast %10 : vector<1x2x128xi32> to vector<4x2x128xi32>
    %12 = arith.cmpi eq, %9, %11 : vector<4x2x128xi32>
    %13 = arith.extui %12 : vector<4x2x128xi1> to vector<4x2x128xi32>
    %14 = arith.sitofp %13 : vector<4x2x128xi32> to vector<4x2x128xf32>
    %cst_9 = arith.constant dense<0xFF800000> : vector<2x128xf32>
    %15 = vector.multi_reduction <maximumf>, %6, %cst_9 [0] : vector<4x2x128xf32> to vector<2x128xf32>
    %16 = vector.shape_cast %15 : vector<2x128xf32> to vector<1x2x128xf32>
    %17 = vector.broadcast %16 : vector<1x2x128xf32> to vector<4x2x128xf32>
    %18 = arith.subf %6, %17 : vector<4x2x128xf32>
    %19 = math.exp %18 : vector<4x2x128xf32>
    %cst_10 = arith.constant dense<0.000000e+00> : vector<2x128xf32>
    %20 = vector.multi_reduction <add>, %19, %cst_10 [0] : vector<4x2x128xf32> to vector<2x128xf32>
    %21 = tpu.reciprocal %20 {approx = true} : vector<2x128xf32> -> vector<2x128xf32>
    %22 = arith.mulf %20, %21 : vector<2x128xf32>
    %cst_11 = arith.constant 2.000000e+00 : f32
    %23 = vector.broadcast %cst_11 : f32 to vector<2x128xf32>
    %24 = arith.subf %23, %22 : vector<2x128xf32>
    %25 = arith.mulf %21, %24 : vector<2x128xf32>
    %26 = vector.shape_cast %25 : vector<2x128xf32> to vector<1x2x128xf32>
    %27 = vector.broadcast %26 : vector<1x2x128xf32> to vector<4x2x128xf32>
    %28 = arith.mulf %19, %27 : vector<4x2x128xf32>
    %29 = arith.mulf %28, %14 : vector<4x2x128xf32>
    %30 = arith.mulf %6, %14 : vector<4x2x128xf32>
    %cst_12 = arith.constant dense<0.000000e+00> : vector<2x128xf32>
    %31 = vector.multi_reduction <add>, %30, %cst_12 [0] : vector<4x2x128xf32> to vector<2x128xf32>
    %cst_13 = arith.constant dense<0.000000e+00> : vector<2x128xf32>
    %32 = vector.multi_reduction <add>, %29, %cst_13 [0] : vector<4x2x128xf32> to vector<2x128xf32>
    %33 = math.log %20 : vector<2x128xf32>
    %34 = arith.subf %15, %31 : vector<2x128xf32>
    %35 = arith.addf %33, %34 : vector<2x128xf32>
    %36 = arith.addf %3, %29 : vector<4x2x128xf32>
    %37 = arith.addf %3, %28 : vector<4x2x128xf32>
    %38 = arith.addf %3, %14 : vector<4x2x128xf32>
    %cst_14 = arith.constant 1.000000e+00 : f32
    %39 = vector.broadcast %cst_14 : f32 to vector<2x128xf32>
    %40 = arith.subf %39, %32 : vector<2x128xf32>
    %cst_15 = arith.constant 1.000000e+00 : f32
    %41 = vector.broadcast %cst_15 : f32 to vector<2x128xf32>
    %42 = arith.mulf %41, %40 : vector<2x128xf32>
    %43 = arith.addf %35, %42 : vector<2x128xf32>
    %44 = arith.addf %4, %43 : vector<2x128xf32>
    %c0_16 = arith.constant 0 : index
    %c0_17 = arith.constant 0 : index
    %c0_18 = arith.constant 0 : index
    %45 = vector.load %arg9[%c0_16, %c0_17, %c0_18] : memref<4x2x128xf32, #tpu.memory_space<vmem>>, vector<4x2x128xf32>
    %46 = arith.addf %45, %36 : vector<4x2x128xf32>
    %c0_19 = arith.constant 0 : index
    %c0_20 = arith.constant 0 : index
    %c0_21 = arith.constant 0 : index
    %47 = vector.load %arg9[%c0_19, %c0_20, %c0_21] : memref<4x2x128xf32, #tpu.memory_space<vmem>>, vector<4x2x128xf32>
    tpu.vector_store %arg9[%c0_19, %c0_20, %c0_21], %46 {strides = array<i32>} : memref<4x2x128xf32, #tpu.memory_space<vmem>>, vector<4x2x128xf32>,
    %c0_22 = arith.constant 0 : index
    %c0_23 = arith.constant 0 : index
    %c0_24 = arith.constant 0 : index
    %48 = vector.load %arg10[%c0_22, %c0_23, %c0_24] : memref<4x2x128xf32, #tpu.memory_space<vmem>>, vector<4x2x128xf32>
    %49 = arith.addf %48, %37 : vector<4x2x128xf32>
    %c0_25 = arith.constant 0 : index
    %c0_26 = arith.constant 0 : index
    %c0_27 = arith.constant 0 : index
    %50 = vector.load %arg10[%c0_25, %c0_26, %c0_27] : memref<4x2x128xf32, #tpu.memory_space<vmem>>, vector<4x2x128xf32>
    tpu.vector_store %arg10[%c0_25, %c0_26, %c0_27], %49 {strides = array<i32>} : memref<4x2x128xf32, #tpu.memory_space<vmem>>, vector<4x2x128xf32>,
    %c0_28 = arith.constant 0 : index
    %c0_29 = arith.constant 0 : index
    %c0_30 = arith.constant 0 : index
    %51 = vector.load %arg11[%c0_28, %c0_29, %c0_30] : memref<4x2x128xf32, #tpu.memory_space<vmem>>, vector<4x2x128xf32>
    %52 = arith.addf %51, %38 : vector<4x2x128xf32>
    %c0_31 = arith.constant 0 : index
    %c0_32 = arith.constant 0 : index
    %c0_33 = arith.constant 0 : index
    %53 = vector.load %arg11[%c0_31, %c0_32, %c0_33] : memref<4x2x128xf32, #tpu.memory_space<vmem>>, vector<4x2x128xf32>
    tpu.vector_store %arg11[%c0_31, %c0_32, %c0_33], %52 {strides = array<i32>} : memref<4x2x128xf32, #tpu.memory_space<vmem>>, vector<4x2x128xf32>,
    %c0_34 = arith.constant 0 : index
    %c0_35 = arith.constant 0 : index
    %54 = vector.load %arg12[%c0_34, %c0_35] : memref<2x128xf32, #tpu.memory_space<vmem>>, vector<2x128xf32>
    %55 = arith.addf %54, %44 : vector<2x128xf32>
    %c0_36 = arith.constant 0 : index
    %c0_37 = arith.constant 0 : index
    %56 = vector.load %arg12[%c0_36, %c0_37] : memref<2x128xf32, #tpu.memory_space<vmem>>, vector<2x128xf32>
    tpu.vector_store %arg12[%c0_36, %c0_37], %55 {strides = array<i32>} : memref<2x128xf32, #tpu.memory_space<vmem>>, vector<2x128xf32>,
    %c0_i32_38 = arith.constant 0 : i32
    %57 = arith.cmpi eq, %arg2, %c0_i32_38 : i32
    %58 = arith.extui %57 : i1 to i32
    %c0_i32_39 = arith.constant 0 : i32
    %59 = arith.cmpi ne, %58, %c0_i32_39 : i32
    scf.if %59 {
      %c0_40 = arith.constant 0 : index
      %c0_41 = arith.constant 0 : index
      %c0_42 = arith.constant 0 : index
      %60 = vector.load %arg9[%c0_40, %c0_41, %c0_42] : memref<4x2x128xf32, #tpu.memory_space<vmem>>, vector<4x2x128xf32>
      %cst_43 = arith.constant dense<0.000000e+00> : vector<4x128xf32>
      %61 = vector.multi_reduction <add>, %60, %cst_43 [1] : vector<4x2x128xf32> to vector<4x128xf32>
      %c0_44 = arith.constant 0 : index
      %c0_45 = arith.constant 0 : index
      %c0_46 = arith.constant 0 : index
      %62 = vector.load %arg5[%c0_44, %c0_45, %c0_46] : memref<1x4x128xf32, #tpu.memory_space<vmem>>, vector<1x4x128xf32>
      %63 = vector.shape_cast %62 : vector<1x4x128xf32> to vector<4x128xf32>
      %64 = vector.shape_cast %61 : vector<4x128xf32> to vector<1x4x128xf32>
      tpu.vector_store %arg5[%c0_44, %c0_45, %c0_46], %64 {strides = array<i32>} : memref<1x4x128xf32, #tpu.memory_space<vmem>>, vector<1x4x128xf32>,
      %c0_47 = arith.constant 0 : index
      %c0_48 = arith.constant 0 : index
      %c0_49 = arith.constant 0 : index
      %65 = vector.load %arg10[%c0_47, %c0_48, %c0_49] : memref<4x2x128xf32, #tpu.memory_space<vmem>>, vector<4x2x128xf32>
      %cst_50 = arith.constant dense<0.000000e+00> : vector<4x128xf32>
      %66 = vector.multi_reduction <add>, %65, %cst_50 [1] : vector<4x2x128xf32> to vector<4x128xf32>
      %c0_51 = arith.constant 0 : index
      %c0_52 = arith.constant 0 : index
      %c0_53 = arith.constant 0 : index
      %67 = vector.load %arg6[%c0_51, %c0_52, %c0_53] : memref<1x4x128xf32, #tpu.memory_space<vmem>>, vector<1x4x128xf32>
      %68 = vector.shape_cast %67 : vector<1x4x128xf32> to vector<4x128xf32>
      %69 = vector.shape_cast %66 : vector<4x128xf32> to vector<1x4x128xf32>
      tpu.vector_store %arg6[%c0_51, %c0_52, %c0_53], %69 {strides = array<i32>} : memref<1x4x128xf32, #tpu.memory_space<vmem>>, vector<1x4x128xf32>,
      %c0_54 = arith.constant 0 : index
      %c0_55 = arith.constant 0 : index
      %c0_56 = arith.constant 0 : index
      %70 = vector.load %arg11[%c0_54, %c0_55, %c0_56] : memref<4x2x128xf32, #tpu.memory_space<vmem>>, vector<4x2x128xf32>
      %cst_57 = arith.constant dense<0.000000e+00> : vector<4x128xf32>
      %71 = vector.multi_reduction <add>, %70, %cst_57 [1] : vector<4x2x128xf32> to vector<4x128xf32>
      %c0_58 = arith.constant 0 : index
      %c0_59 = arith.constant 0 : index
      %c0_60 = arith.constant 0 : index
      %72 = vector.load %arg7[%c0_58, %c0_59, %c0_60] : memref<1x4x128xf32, #tpu.memory_space<vmem>>, vector<1x4x128xf32>
      %73 = vector.shape_cast %72 : vector<1x4x128xf32> to vector<4x128xf32>
      %74 = vector.shape_cast %71 : vector<4x128xf32> to vector<1x4x128xf32>
      tpu.vector_store %arg7[%c0_58, %c0_59, %c0_60], %74 {strides = array<i32>} : memref<1x4x128xf32, #tpu.memory_space<vmem>>, vector<1x4x128xf32>,
      %c0_61 = arith.constant 0 : index
      %c0_62 = arith.constant 0 : index
      %75 = vector.load %arg12[%c0_61, %c0_62] : memref<2x128xf32, #tpu.memory_space<vmem>>, vector<2x128xf32>
      %cst_63 = arith.constant dense<0.000000e+00> : vector<128xf32>
      %76 = vector.multi_reduction <add>, %75, %cst_63 [0] : vector<2x128xf32> to vector<128xf32>
      %77 = vector.shape_cast %76 : vector<128xf32> to vector<1x128xf32>
      %c0_64 = arith.constant 0 : index
      %c0_65 = arith.constant 0 : index
      %c0_66 = arith.constant 0 : index
      %78 = vector.load %arg8[%c0_64, %c0_65, %c0_66] : memref<1x1x128xf32, #tpu.memory_space<vmem>>, vector<1x1x128xf32>
      %79 = vector.shape_cast %78 : vector<1x1x128xf32> to vector<1x128xf32>
      %80 = vector.shape_cast %77 : vector<1x128xf32> to vector<1x1x128xf32>
      tpu.vector_store %arg8[%c0_64, %c0_65, %c0_66], %80 {strides = array<i32>} : memref<1x1x128xf32, #tpu.memory_space<vmem>>, vector<1x1x128xf32>,
    } else {
    }
    return
  }
  func.func @transform_0(%arg0: i32, %arg1: i32, %arg2: i32) -> (i32, i32, i32, i32) {
    %c1_i32 = arith.constant 1 : i32
    %0 = arith.muli %arg1, %c1_i32 : i32
    %1 = arith.addi %0, %arg2 : i32
    %c0_i32 = arith.constant 0 : i32
    %c0_i32_0 = arith.constant 0 : i32
    %c0_i32_1 = arith.constant 0 : i32
    return %arg0, %c0_i32, %1, %c0_i32_0 : i32, i32, i32, i32
  }
  func.func @transform_1(%arg0: i32, %arg1: i32, %arg2: i32) -> (i32, i32, i32, i32) {
    %c1_i32 = arith.constant 1 : i32
    %0 = arith.muli %arg1, %c1_i32 : i32
    %1 = arith.addi %0, %arg2 : i32
    %c0_i32 = arith.constant 0 : i32
    %c0_i32_0 = arith.constant 0 : i32
    %c0_i32_1 = arith.constant 0 : i32
    return %arg0, %c0_i32, %1, %c0_i32_0 : i32, i32, i32, i32
  }
  func.func @transform_2(%arg0: i32, %arg1: i32, %arg2: i32) -> (i32, i32, i32) {
    %c1_i32 = arith.constant 1 : i32
    %0 = arith.muli %arg0, %c1_i32 : i32
    %1 = arith.addi %0, %arg1 : i32
    %c0_i32 = arith.constant 0 : i32
    %c0_i32_0 = arith.constant 0 : i32
    %c0_i32_1 = arith.constant 0 : i32
    return %1, %c0_i32, %c0_i32_0 : i32, i32, i32
  }
  func.func @transform_3(%arg0: i32, %arg1: i32, %arg2: i32) -> (i32, i32, i32) {
    %c1_i32 = arith.constant 1 : i32
    %0 = arith.muli %arg0, %c1_i32 : i32
    %1 = arith.addi %0, %arg1 : i32
    %c0_i32 = arith.constant 0 : i32
    %c0_i32_0 = arith.constant 0 : i32
    %c0_i32_1 = arith.constant 0 : i32
    return %1, %c0_i32, %c0_i32_0 : i32, i32, i32
  }
  func.func @transform_4(%arg0: i32, %arg1: i32, %arg2: i32) -> (i32, i32, i32) {
    %c1_i32 = arith.constant 1 : i32
    %0 = arith.muli %arg0, %c1_i32 : i32
    %1 = arith.addi %0, %arg1 : i32
    %c0_i32 = arith.constant 0 : i32
    %c0_i32_0 = arith.constant 0 : i32
    %c0_i32_1 = arith.constant 0 : i32
    return %1, %c0_i32, %c0_i32_0 : i32, i32, i32
  }
  func.func @transform_5(%arg0: i32, %arg1: i32, %arg2: i32) -> (i32, i32, i32) {
    %c1_i32 = arith.constant 1 : i32
    %0 = arith.muli %arg0, %c1_i32 : i32
    %1 = arith.addi %0, %arg1 : i32
    %c0_i32 = arith.constant 0 : i32
    %c0_i32_0 = arith.constant 0 : i32
    %c0_i32_1 = arith.constant 0 : i32
    return %1, %c0_i32, %c0_i32_0 : i32, i32, i32
  }
}

</mosaic_0001>

<llo_original>
// kernel: dc_and_poly1ce_loss.1
$region0: #{dc_and_poly1ce_loss.1}
  #allocation0 [shape = 'u32[]', space=smem, size = 0x4, offset = 0x4, fixed_abs, tag = 'smem constant byte address 0x4 - core index']
  #allocation1 [shape = 'u32[144,128]{1,0:T(1,128)}', space=vmem, size = 0x12000, scoped, tag = 'internal scratch']
  #allocation2 [shape = 'f32[4,2,128]{2,1,0:T(2,128)}', space=vmem, size = 0x1000, scoped, tag = 'scratch operand']
  #allocation3 [shape = 'f32[4,2,128]{2,1,0:T(2,128)}', space=vmem, size = 0x1000, scoped, tag = 'scratch operand']
  #allocation4 [shape = 'f32[4,2,128]{2,1,0:T(2,128)}', space=vmem, size = 0x1000, scoped, tag = 'scratch operand']
  #allocation5 [shape = 'f32[2,128]{1,0:T(2,128)}', space=vmem, size = 0x400, scoped, tag = 'scratch operand']
  %s0 = inlined_call_operand.vmem [shape: f32[2,4,2,128], index: 0, kind: input, shape index: {}]
  %s1 = inlined_call_operand.vmem [shape: s32[2,1,2,128], index: 1, kind: input, shape index: {}]
  %s2 = inlined_call_operand.vmem [shape: f32[2,4,128], index: 2, kind: output, shape index: {0}]
  %s3 = inlined_call_operand.vmem [shape: f32[2,4,128], index: 3, kind: output, shape index: {1}]
  %s4 = inlined_call_operand.vmem [shape: f32[2,4,128], index: 4, kind: output, shape index: {2}]
  %s5 = inlined_call_operand.vmem [shape: f32[2,1,128], index: 5, kind: output, shape index: {3}]
  %6 = xla_tuple %s2, %s3, %s4, %s5
  %s7 = sld [smem:[#allocation0]]
  $region73: #{dc_and_poly1ce_loss.1} parent=0
    _
  %s9 = ssub.s32 1, %s7
  %s10 = scalar_select 0, %s9, %s7
  loop: start=0, step=1, limit=4
  $region2: #{dc_and_poly1ce_loss.1} parent=0 // loop_pre_header
    _
  $region3: #{dc_and_poly1ce_loss.1} parent=0 // loop_header
    %s12 = sphi 0, %s16
    %p13 = scmp.ge.s32.totalorder %s12, 4
    %s19 = sphi 0, %s38
    %s20 = sphi 0, %s34
    %s21 = sphi 0, %s30
    %s22 = sphi 0, %s19
    %s23 = sphi 0, %s20
    %s24 = sphi 0, %s21
    %s25 = sphi 0, %s22
    %s26 = sphi 0, %s23
    %s27 = sphi 0, %s24
    %s45 = sphi 0, %s47
    %s48 = sphi 0, %s45
    %s49 = sphi 0, %s48
    %s65 = sphi 0, %s49
    %s75 = sphi 0, %s77
    %s78 = sphi 0, %s75
    %s79 = sphi 0, %s78
    %s95 = sphi 0, %s79
    %s103 = sphi 0, %s105
    %s106 = sphi 0, %s103
    %s107 = sphi 0, %s106
    %s123 = sphi 0, %s107
    %s131 = sphi 0, %s133
    %s134 = sphi 0, %s131
    %s135 = sphi 0, %s134
    %s151 = sphi 0, %s135
    %s159 = sphi 0, %s161
    %s162 = sphi 0, %s159
    %s163 = sphi 0, %s162
    %s179 = sphi 0, %s163
    %s187 = sphi 0, %s189
    %s190 = sphi 0, %s187
    %s191 = sphi 0, %s190
    %s207 = sphi 0, %s191
  $region4: #{dc_and_poly1ce_loss.1} parent=0 // loop_header_branch
    %15 = sbr.rel (%p13) target = $region8
  $region5: #{dc_and_poly1ce_loss.1} parent=0 // loop_body
    %s17 = ssub.s32 %s12, 1
    %s18 = ssub.s32 %s12, 2
    %s28 = sadd.s32 1, %s21
    %p29 = scmp.ge.s32.totalorder %s28, 1
    %s30 = scalar_select %p29, 0, %s28
    %s31 = sadd.s32 1, %s20
    %s32 = scalar_select %p29, %s31, %s20
    %p33 = scmp.ge.s32.totalorder %s32, 1
    %s34 = scalar_select %p33, 0, %s32
    %s35 = sadd.s32 1, %s19
    %s36 = scalar_select %p33, %s35, %s19
    %p37 = scmp.ge.s32.totalorder %s36, 2
    %s38 = scalar_select %p37, 0, %s36
    %s39 = sadd.s32 %s20, %s21
    %s40 = sadd.s32 %s34, %s30
    %s41 = ssub.s32 %s19, %s38
    %s42 = ssub.s32 %s39, %s40
    %s43 = sor.u32 %s41, %s42
    %p44 = scmp.eq.s32.totalorder %s43, 0
    %s46 = sadd.s32 %s45, 1
    %s47 = scalar_select %p44, %s45, %s46
    %p50 = pneg %p44
    %p51 = scmp.eq.s32.totalorder %s12, 1
    %p52 = por %p50, %p51
    %p53 = scmp.ne.s32.totalorder %s45, %s48
    %p54 = scmp.eq.s32.totalorder %s12, 0
    %p55 = por %p53, %p54
    %p56 = scmp.ne.s32.totalorder %s45, %s48
    %p57 = scmp.eq.s32.totalorder %s17, 1
    %p58 = por %p56, %p57
    %p59 = scmp.ne.s32.totalorder %s48, %s49
    %p60 = scmp.eq.s32.totalorder %s17, 0
    %p61 = por %p59, %p60
    %p62 = scmp.ne.s32.totalorder %s48, %s49
    %p63 = scmp.eq.s32.totalorder %s18, 1
    %p64 = por %p62, %p63
    %p66 = scmp.ne.s32.totalorder %s49, %s65
    %p67 = scmp.eq.s32.totalorder %s18, 0
    %p68 = por %p66, %p67
    %s69 = sadd.s32 %s20, %s21
    %s70 = sadd.s32 %s34, %s30
    %s71 = ssub.s32 %s19, %s38
    %s72 = ssub.s32 %s69, %s70
    %s73 = sor.u32 %s71, %s72
    %p74 = scmp.eq.s32.totalorder %s73, 0
    %s76 = sadd.s32 %s75, 1
    %s77 = scalar_select %p74, %s75, %s76
    %p80 = pneg %p74
    %p81 = scmp.eq.s32.totalorder %s12, 1
    %p82 = por %p80, %p81
    %p83 = scmp.ne.s32.totalorder %s75, %s78
    %p84 = scmp.eq.s32.totalorder %s12, 0
    %p85 = por %p83, %p84
    %p86 = scmp.ne.s32.totalorder %s75, %s78
    %p87 = scmp.eq.s32.totalorder %s17, 1
    %p88 = por %p86, %p87
    %p89 = scmp.ne.s32.totalorder %s78, %s79
    %p90 = scmp.eq.s32.totalorder %s17, 0
    %p91 = por %p89, %p90
    %p92 = scmp.ne.s32.totalorder %s78, %s79
    %p93 = scmp.eq.s32.totalorder %s18, 1
    %p94 = por %p92, %p93
    %p96 = scmp.ne.s32.totalorder %s79, %s95
    %p97 = scmp.eq.s32.totalorder %s18, 0
    %p98 = por %p96, %p97
    %s99 = sadd.s32 %s19, %s20
    %s100 = sadd.s32 %s38, %s34
    %s101 = ssub.s32 %s99, %s100
    %p102 = scmp.eq.s32.totalorder %s101, 0
    %s104 = sadd.s32 %s103, 1
    %s105 = scalar_select %p102, %s103, %s104
    %p108 = pneg %p102
    %p109 = scmp.eq.s32.totalorder %s12, 1
    %p110 = por %p108, %p109
    %p111 = scmp.ne.s32.totalorder %s103, %s106
    %p112 = scmp.eq.s32.totalorder %s12, 0
    %p113 = por %p111, %p112
    %p114 = scmp.ne.s32.totalorder %s103, %s106
    %p115 = scmp.eq.s32.totalorder %s17, 1
    %p116 = por %p114, %p115
    %p117 = scmp.ne.s32.totalorder %s106, %s107
    %p118 = scmp.eq.s32.totalorder %s17, 0
    %p119 = por %p117, %p118
    %p120 = scmp.ne.s32.totalorder %s106, %s107
    %p121 = scmp.eq.s32.totalorder %s18, 1
    %p122 = por %p120, %p121
    %p124 = scmp.ne.s32.totalorder %s107, %s123
    %p125 = scmp.eq.s32.totalorder %s18, 0
    %p126 = por %p124, %p125
    %s127 = sadd.s32 %s19, %s20
    %s128 = sadd.s32 %s38, %s34
    %s129 = ssub.s32 %s127, %s128
    %p130 = scmp.eq.s32.totalorder %s129, 0
    %s132 = sadd.s32 %s131, 1
    %s133 = scalar_select %p130, %s131, %s132
    %p136 = pneg %p130
    %p137 = scmp.eq.s32.totalorder %s12, 1
    %p138 = por %p136, %p137
    %p139 = scmp.ne.s32.totalorder %s131, %s134
    %p140 = scmp.eq.s32.totalorder %s12, 0
    %p141 = por %p139, %p140
    %p142 = scmp.ne.s32.totalorder %s131, %s134
    %p143 = scmp.eq.s32.totalorder %s17, 1
    %p144 = por %p142, %p143
    %p145 = scmp.ne.s32.totalorder %s134, %s135
    %p146 = scmp.eq.s32.totalorder %s17, 0
    %p147 = por %p145, %p146
    %p148 = scmp.ne.s32.totalorder %s134, %s135
    %p149 = scmp.eq.s32.totalorder %s18, 1
    %p150 = por %p148, %p149
    %p152 = scmp.ne.s32.totalorder %s135, %s151
    %p153 = scmp.eq.s32.totalorder %s18, 0
    %p154 = por %p152, %p153
    %s155 = sadd.s32 %s19, %s20
    %s156 = sadd.s32 %s38, %s34
    %s157 = ssub.s32 %s155, %s156
    %p158 = scmp.eq.s32.totalorder %s157, 0
    %s160 = sadd.s32 %s159, 1
    %s161 = scalar_select %p158, %s159, %s160
    %p164 = pneg %p158
    %p165 = scmp.eq.s32.totalorder %s12, 1
    %p166 = por %p164, %p165
    %p167 = scmp.ne.s32.totalorder %s159, %s162
    %p168 = scmp.eq.s32.totalorder %s12, 0
    %p169 = por %p167, %p168
    %p170 = scmp.ne.s32.totalorder %s159, %s162
    %p171 = scmp.eq.s32.totalorder %s17, 1
    %p172 = por %p170, %p171
    %p173 = scmp.ne.s32.totalorder %s162, %s163
    %p174 = scmp.eq.s32.totalorder %s17, 0
    %p175 = por %p173, %p174
    %p176 = scmp.ne.s32.totalorder %s162, %s163
    %p177 = scmp.eq.s32.totalorder %s18, 1
    %p178 = por %p176, %p177
    %p180 = scmp.ne.s32.totalorder %s163, %s179
    %p181 = scmp.eq.s32.totalorder %s18, 0
    %p182 = por %p180, %p181
    %s183 = sadd.s32 %s19, %s20
    %s184 = sadd.s32 %s38, %s34
    %s185 = ssub.s32 %s183, %s184
    %p186 = scmp.eq.s32.totalorder %s185, 0
    %s188 = sadd.s32 %s187, 1
    %s189 = scalar_select %p186, %s187, %s188
    %p192 = pneg %p186
    %p193 = scmp.eq.s32.totalorder %s12, 1
    %p194 = por %p192, %p193
    %p195 = scmp.ne.s32.totalorder %s187, %s190
    %p196 = scmp.eq.s32.totalorder %s12, 0
    %p197 = por %p195, %p196
    %p198 = scmp.ne.s32.totalorder %s187, %s190
    %p199 = scmp.eq.s32.totalorder %s17, 1
    %p200 = por %p198, %p199
    %p201 = scmp.ne.s32.totalorder %s190, %s191
    %p202 = scmp.eq.s32.totalorder %s17, 0
    %p203 = por %p201, %p202
    %p204 = scmp.ne.s32.totalorder %s190, %s191
    %p205 = scmp.eq.s32.totalorder %s18, 1
    %p206 = por %p204, %p205
    %p208 = scmp.ne.s32.totalorder %s191, %s207
    %p209 = scmp.eq.s32.totalorder %s18, 0
    %p210 = por %p208, %p209
    %p211 = scmp.le.s32.totalorder 1, %s12
    %p212 = scmp.lt.s32.totalorder %s12, 3
    %p213 = pnand %p211, %p212
    %p214 = pneg %p213
    // Predicated region
    $region9: #{dc_and_poly1ce_loss.1} parent=5 // pred_check
      _
    $region10: #{dc_and_poly1ce_loss.1} parent=5 // pred_check_branch
      %216 = sbr.rel (%p213) target = $region12
    $region11: #{dc_and_poly1ce_loss.1} parent=5 // pred_region
      %s217 = ssub.s32 %s12, 1
    $region12: #{dc_and_poly1ce_loss.1} parent=5 // pred_fallthru
      _
    %p218 = scmp.lt.s32.totalorder %s12, 2
    // Predicated region
    $region13: #{dc_and_poly1ce_loss.1} parent=5 // pred_check
      %p219 = pneg %p218
    $region14: #{dc_and_poly1ce_loss.1} parent=5 // pred_check_branch
      %221 = sbr.rel (%p219) target = $region16
    $region15: #{dc_and_poly1ce_loss.1} parent=5 // pred_region
      // Predicated region
      $region17: #{dc_and_poly1ce_loss.1} parent=15 // pred_check
        %p222 = pneg %p55
      $region18: #{dc_and_poly1ce_loss.1} parent=15 // pred_check_branch
        %224 = sbr.rel (%p222) target = $region20
      $region19: #{dc_and_poly1ce_loss.1} parent=15 // pred_region
        %s225 = sadd.s32 %s20, %s21
        %p226 = scmp.lt.s32.totalorder %s19, 1
        %s227 = scalar_select %p226, %s19, 1
        %p228 = scmp.lt.s32.totalorder %s225, 0
        %s229 = scalar_select %p228, %s225, 0
        %s230 = smul.addr %s227, 4
        %s231 = sadd.s32 %s229, %s230
        %s232 = smul.addr %s231, 2
        %s233 = scalar_lea.vmem %s0, %s232
        %s234 = sadd.s32 %s20, %s21
      $region20: #{dc_and_poly1ce_loss.1} parent=15 // pred_fallthru
        _
      // Predicated region
      $region21: #{dc_and_poly1ce_loss.1} parent=15 // pred_check
        %p235 = pneg %p85
      $region22: #{dc_and_poly1ce_loss.1} parent=15 // pred_check_branch
        %237 = sbr.rel (%p235) target = $region24
      $region23: #{dc_and_poly1ce_loss.1} parent=15 // pred_region
        %s238 = sadd.s32 %s20, %s21
        %p239 = scmp.lt.s32.totalorder %s19, 1
        %s240 = scalar_select %p239, %s19, 1
        %p241 = scmp.lt.s32.totalorder %s238, 0
        %s242 = scalar_select %p241, %s238, 0
        %s243 = sadd.s32 %s242, %s240
        %s244 = smul.addr %s243, 2
        %s245 = scalar_lea.vmem %s1, %s244
        %s246 = sadd.s32 %s20, %s21
      $region24: #{dc_and_poly1ce_loss.1} parent=15 // pred_fallthru
        _
    $region16: #{dc_and_poly1ce_loss.1} parent=5 // pred_fallthru
      _
    %p247 = scmp.le.s32.totalorder 1, %s12
    %p248 = scmp.lt.s32.totalorder %s12, 3
    %p249 = pnand %p247, %p248
    %p250 = pneg %p249
    // Predicated region
    $region25: #{dc_and_poly1ce_loss.1} parent=5 // pred_check
      _
    $region26: #{dc_and_poly1ce_loss.1} parent=5 // pred_check_branch
      %252 = sbr.rel (%p249) target = $region28
    $region27: #{dc_and_poly1ce_loss.1} parent=5 // pred_region
      %s253 = ssub.s32 %s12, 1
      %s254 = sadd.s32 %s23, %s24
      %p255 = scmp.lt.s32.totalorder %s22, 1
      %s256 = scalar_select %p255, %s22, 1
      %p257 = scmp.lt.s32.totalorder %s254, 0
      %s258 = scalar_select %p257, %s254, 0
      %s259 = smul.addr %s256, 4
      %s260 = sadd.s32 %s258, %s259
      %s261 = smul.addr %s260, 2
      %s262 = scalar_lea.vmem %s0, %s261
      %p263 = pneg %p61
      %p264 = pneg %p58
      %s265 = sadd.s32 %s23, %s24
      %p266 = scmp.lt.s32.totalorder %s22, 1
      %s267 = scalar_select %p266, %s22, 1
      %p268 = scmp.lt.s32.totalorder %s265, 0
      %s269 = scalar_select %p268, %s265, 0
      %s270 = sadd.s32 %s269, %s267
      %s271 = smul.addr %s270, 2
      %s272 = scalar_lea.vmem %s1, %s271
      %p273 = pneg %p91
      %p274 = pneg %p88
      %p275 = pneg %p119
      %p276 = pneg %p116
      %s277 = sadd.s32 %s22, %s23
      %p278 = scmp.lt.s32.totalorder %s277, 1
      %s279 = scalar_select %p278, %s277, 1
      %s280 = smul.addr %s279, 4
      %s281 = scalar_lea.vmem %s2, %s280
      %p282 = pneg %p147
      %p283 = pneg %p144
      %s284 = sadd.s32 %s22, %s23
      %p285 = scmp.lt.s32.totalorder %s284, 1
      %s286 = scalar_select %p285, %s284, 1
      %s287 = smul.addr %s286, 4
      %s288 = scalar_lea.vmem %s3, %s287
      %p289 = pneg %p175
      %p290 = pneg %p172
      %s291 = sadd.s32 %s22, %s23
      %p292 = scmp.lt.s32.totalorder %s291, 1
      %s293 = scalar_select %p292, %s291, 1
      %s294 = smul.addr %s293, 4
      %s295 = scalar_lea.vmem %s4, %s294
      %p296 = pneg %p203
      %p297 = pneg %p200
      %s298 = sadd.s32 %s22, %s23
      %p299 = scmp.lt.s32.totalorder %s298, 1
      %s300 = scalar_select %p299, %s298, 1
      %s301 = scalar_lea.vmem %s5, %s300
      %s302 = sadd.s32 %s23, %s24
      %p303 = scmp.lt.s32.totalorder %s22, 1
      %s304 = scalar_select %p303, %s22, 1
      %p305 = scmp.lt.s32.totalorder %s302, 0
      %s306 = scalar_select %p305, %s302, 0
      %s307 = smul.addr %s304, 4
      %s308 = sadd.s32 %s306, %s307
      %s309 = smul.addr %s308, 2
      %s310 = scalar_lea.vmem %s0, %s309
      %s311 = sadd.s32 %s23, %s24
      %s312 = sadd.s32 %s23, %s24
      %p313 = scmp.lt.s32.totalorder %s22, 1
      %s314 = scalar_select %p313, %s22, 1
      %p315 = scmp.lt.s32.totalorder %s312, 0
      %s316 = scalar_select %p315, %s312, 0
      %s317 = sadd.s32 %s316, %s314
      %s318 = smul.addr %s317, 2
      %s319 = scalar_lea.vmem %s1, %s318
      %s320 = sadd.s32 %s23, %s24
      %s321 = sadd.s32 %s22, %s23
      %p322 = scmp.lt.s32.totalorder %s321, 1
      %s323 = scalar_select %p322, %s321, 1
      %s324 = smul.addr %s323, 4
      %s325 = scalar_lea.vmem %s2, %s324
      %s326 = sadd.s32 %s22, %s23
      %s327 = sadd.s32 %s22, %s23
      %p328 = scmp.lt.s32.totalorder %s327, 1
      %s329 = scalar_select %p328, %s327, 1
      %s330 = smul.addr %s329, 4
      %s331 = scalar_lea.vmem %s3, %s330
      %s332 = sadd.s32 %s22, %s23
      %s333 = sadd.s32 %s22, %s23
      %p334 = scmp.lt.s32.totalorder %s333, 1
      %s335 = scalar_select %p334, %s333, 1
      %s336 = smul.addr %s335, 4
      %s337 = scalar_lea.vmem %s4, %s336
      %s338 = sadd.s32 %s22, %s23
      %s339 = sadd.s32 %s22, %s23
      %p340 = scmp.lt.s32.totalorder %s339, 1
      %s341 = scalar_select %p340, %s339, 1
      %s342 = scalar_lea.vmem %s5, %s341
      %s343 = sadd.s32 %s22, %s23
      %p344 = scmp.eq.s32.totalorder %s24, 0
      // Predicated region
      $region29: #{dc_and_poly1ce_loss.1} parent=27 // pred_check
        %p345 = pneg %p344
      $region30: #{dc_and_poly1ce_loss.1} parent=27 // pred_check_branch
        %347 = sbr.rel (%p345) target = $region32
      $region31: #{dc_and_poly1ce_loss.1} parent=27 // pred_region
        %348 = vst [vmem:[#allocation2] sm:$0x3] 0.0
        %349 = vst [vmem:[#allocation2 + $0x2] sm:$0x3] 0.0
        %350 = vst [vmem:[#allocation2 + $0x4] sm:$0x3] 0.0
        %351 = vst [vmem:[#allocation2 + $0x6] sm:$0x3] 0.0
        %352 = vst [vmem:[#allocation3] sm:$0x3] 0.0
        %353 = vst [vmem:[#allocation3 + $0x2] sm:$0x3] 0.0
        %354 = vst [vmem:[#allocation3 + $0x4] sm:$0x3] 0.0
        %355 = vst [vmem:[#allocation3 + $0x6] sm:$0x3] 0.0
        %356 = vst [vmem:[#allocation4] sm:$0x3] 0.0
        %357 = vst [vmem:[#allocation4 + $0x2] sm:$0x3] 0.0
        %358 = vst [vmem:[#allocation4 + $0x4] sm:$0x3] 0.0
        %359 = vst [vmem:[#allocation4 + $0x6] sm:$0x3] 0.0
        %360 = vst [vmem:[#allocation5] sm:$0x3] 0.0
      $region32: #{dc_and_poly1ce_loss.1} parent=27 // pred_fallthru
        _
      %v361 = vld [vmem:[%s310] sm:$0x3]
      %v362 = vld [vmem:[%s310 + $0x2] sm:$0x3]
      %v363 = vld [vmem:[%s310 + $0x4] sm:$0x3]
      %v364 = vld [vmem:[%s310 + $0x6] sm:$0x3]
      %v365 = vld [vmem:[%s319] sm:$0x3]
      %vm366 = vcmp.eq.s32.totalorder %v365, 0
      %vm367 = vcmp.eq.s32.totalorder %v365, 1
      %vm368 = vcmp.eq.s32.totalorder %v365, 2
      %vm369 = vcmp.eq.s32.totalorder %v365, 3
      %v370 = vsel %vm366, 1, 0
      %v371 = vsel %vm367, 1, 0
      %v372 = vsel %vm368, 1, 0
      %v373 = vsel %vm369, 1, 0
      %v374 = vcvt.s32.f32 %v370
      %v375 = vcvt.s32.f32 %v371
      %v376 = vcvt.s32.f32 %v372
      %v377 = vcvt.s32.f32 %v373
      %vm378 = vcmask 1041408
      %v379 = vsel %vm378, %v361, -inf
      %v380 = vsel %vm378, %v362, -inf
      %v381 = vsel %vm378, %v363, -inf
      %v382 = vsel %vm378, %v364, -inf
      %v383 = vmax.f32 %v379, %v380
      %v384 = vmax.f32 %v381, %v382
      %v385 = vmax.f32 %v383, %v384
      %v386 = vsub.f32 %v361, %v385
      %v387 = vsub.f32 %v362, %v385
      %v388 = vsub.f32 %v363, %v385
      %v389 = vsub.f32 %v364, %v385
      %v390 = vmul.f32 %v386, 1.442695
      %v391 = vpow.pop %v390
      %v392 = vmul.f32 %v387, 1.442695
      %v393 = vpow.pop %v392
      %v394 = vmul.f32 %v388, 1.442695
      %v395 = vpow.pop %v394
      %v396 = vmul.f32 %v389, 1.442695
      %v397 = vpow.pop %v396
      %v398 = vsel %vm378, %v391, 0.0
      %v399 = vsel %vm378, %v393, 0.0
      %v400 = vadd.f32 %v398, %v399
      %v401 = vsel %vm378, %v395, 0.0
      %v402 = vadd.f32 %v400, %v401
      %v403 = vsel %vm378, %v397, 0.0
      %v404 = vadd.f32 %v402, %v403
      %v405 = vrcp.pop %v404
      %v406 = vmul.f32 %v404, %v405
      %v407 = vsub.f32 2.0, %v406
      %v408 = vmul.f32 %v405, %v407
      %v409 = vmul.f32 %v391, %v408
      %v410 = vmul.f32 %v393, %v408
      %v411 = vmul.f32 %v395, %v408
      %v412 = vmul.f32 %v397, %v408
      %v413 = vmul.f32 %v409, %v374
      %v414 = vmul.f32 %v410, %v375
      %v415 = vmul.f32 %v411, %v376
      %v416 = vmul.f32 %v412, %v377
      %v417 = vmul.f32 %v361, %v374
      %v418 = vmul.f32 %v362, %v375
      %v419 = vmul.f32 %v363, %v376
      %v420 = vmul.f32 %v364, %v377
      %v421 = vsel %vm378, %v417, 0.0
      %v422 = vsel %vm378, %v418, 0.0
      %v423 = vadd.f32 %v421, %v422
      %v424 = vsel %vm378, %v419, 0.0
      %v425 = vadd.f32 %v423, %v424
      %v426 = vsel %vm378, %v420, 0.0
      %v427 = vadd.f32 %v425, %v426
      %v428 = vsel %vm378, %v413, 0.0
      %v429 = vsel %vm378, %v414, 0.0
      %v430 = vadd.f32 %v428, %v429
      %v431 = vsel %vm378, %v415, 0.0
      %v432 = vadd.f32 %v430, %v431
      %v433 = vsel %vm378, %v416, 0.0
      %v434 = vadd.f32 %v432, %v433
      %v435 = vlog2.pop %v404
      %v436 = vmul.f32 %v435, 0.6931472
      %v437 = vsub.f32 %v385, %v427
      %v438 = vadd.f32 %v436, %v437
      %v439 = vadd.f32 %v413, 0.0
      %v440 = vadd.f32 %v414, 0.0
      %v441 = vadd.f32 %v415, 0.0
      %v442 = vadd.f32 %v416, 0.0
      %v443 = vadd.f32 %v409, 0.0
      %v444 = vadd.f32 %v410, 0.0
      %v445 = vadd.f32 %v411, 0.0
      %v446 = vadd.f32 %v412, 0.0
      %v447 = vadd.f32 %v374, 0.0
      %v448 = vadd.f32 %v375, 0.0
      %v449 = vadd.f32 %v376, 0.0
      %v450 = vadd.f32 %v377, 0.0
      %v451 = vsub.f32 1.0, %v434
      %v452 = vadd.f32 %v438, %v451
      %v453 = vadd.f32 %v452, 0.0
      %v454 = vld [vmem:[#allocation2] sm:$0x3]
      %v455 = vld [vmem:[#allocation2 + $0x2] sm:$0x3]
      %v456 = vld [vmem:[#allocation2 + $0x4] sm:$0x3]
      %v457 = vld [vmem:[#allocation2 + $0x6] sm:$0x3]
      %v458 = vadd.f32 %v454, %v439
      %v459 = vadd.f32 %v455, %v440
      %v460 = vadd.f32 %v456, %v441
      %v461 = vadd.f32 %v457, %v442
      %462 = vst [vmem:[#allocation2] sm:$0x3] %v458
      %463 = vst [vmem:[#allocation2 + $0x2] sm:$0x3] %v459
      %464 = vst [vmem:[#allocation2 + $0x4] sm:$0x3] %v460
      %465 = vst [vmem:[#allocation2 + $0x6] sm:$0x3] %v461
      %v466 = vld [vmem:[#allocation3] sm:$0x3]
      %v467 = vld [vmem:[#allocation3 + $0x2] sm:$0x3]
      %v468 = vld [vmem:[#allocation3 + $0x4] sm:$0x3]
      %v469 = vld [vmem:[#allocation3 + $0x6] sm:$0x3]
      %v470 = vadd.f32 %v466, %v443
      %v471 = vadd.f32 %v467, %v444
      %v472 = vadd.f32 %v468, %v445
      %v473 = vadd.f32 %v469, %v446
      %474 = vst [vmem:[#allocation3] sm:$0x3] %v470
      %475 = vst [vmem:[#allocation3 + $0x2] sm:$0x3] %v471
      %476 = vst [vmem:[#allocation3 + $0x4] sm:$0x3] %v472
      %477 = vst [vmem:[#allocation3 + $0x6] sm:$0x3] %v473
      %v478 = vld [vmem:[#allocation4] sm:$0x3]
      %v479 = vld [vmem:[#allocation4 + $0x2] sm:$0x3]
      %v480 = vld [vmem:[#allocation4 + $0x4] sm:$0x3]
      %v481 = vld [vmem:[#allocation4 + $0x6] sm:$0x3]
      %v482 = vadd.f32 %v478, %v447
      %v483 = vadd.f32 %v479, %v448
      %v484 = vadd.f32 %v480, %v449
      %v485 = vadd.f32 %v481, %v450
      %486 = vst [vmem:[#allocation4] sm:$0x3] %v482
      %487 = vst [vmem:[#allocation4 + $0x2] sm:$0x3] %v483
      %488 = vst [vmem:[#allocation4 + $0x4] sm:$0x3] %v484
      %489 = vst [vmem:[#allocation4 + $0x6] sm:$0x3] %v485
      %v490 = vld [vmem:[#allocation5] sm:$0x3]
      %v491 = vadd.f32 %v490, %v453
      %492 = vst [vmem:[#allocation5] sm:$0x3] %v491
      // Predicated region
      $region33: #{dc_and_poly1ce_loss.1} parent=27 // pred_check
        %p493 = pneg %p344
      $region34: #{dc_and_poly1ce_loss.1} parent=27 // pred_check_branch
        %495 = sbr.rel (%p493) target = $region36
      $region35: #{dc_and_poly1ce_loss.1} parent=27 // pred_region
        %v496 = vld [vmem:[#allocation2] sm:$0x3]
        %v497 = vld [vmem:[#allocation2 + $0x2] sm:$0x3]
        %v498 = vld [vmem:[#allocation2 + $0x4] sm:$0x3]
        %v499 = vld [vmem:[#allocation2 + $0x6] sm:$0x3]
        %v500 = vsel %vm378, %v496, 0.0
        %v501 = vrot.slane %v500, 4
        %v502 = vadd.f32 %v500, %v501
        %v503 = vrot.slane %v502, 2
        %v504 = vadd.f32 %v502, %v503
        %v505 = vrot.slane %v504, 1
        %v506 = vadd.f32 %v504, %v505
        %v507 = vsel %vm378, %v497, 0.0
        %v508 = vrot.slane %v507, 4
        %v509 = vadd.f32 %v507, %v508
        %v510 = vrot.slane %v509, 2
        %v511 = vadd.f32 %v509, %v510
        %v512 = vrot.slane %v511, 1
        %v513 = vadd.f32 %v511, %v512
        %v514 = vsel %vm378, %v498, 0.0
        %v515 = vrot.slane %v514, 4
        %v516 = vadd.f32 %v514, %v515
        %v517 = vrot.slane %v516, 2
        %v518 = vadd.f32 %v516, %v517
        %v519 = vrot.slane %v518, 1
        %v520 = vadd.f32 %v518, %v519
        %v521 = vsel %vm378, %v499, 0.0
        %v522 = vrot.slane %v521, 4
        %v523 = vadd.f32 %v521, %v522
        %v524 = vrot.slane %v523, 2
        %v525 = vadd.f32 %v523, %v524
        %v526 = vrot.slane %v525, 1
        %v527 = vadd.f32 %v525, %v526
        %vm532 = vcmask 1041409
        %v533 = vsel %vm532, %v513, %v506
        %vm534 = vcmask 1042434
        %v535 = vsel %vm534, %v520, %v533
        %vm536 = vcmask 1043459
        %v537 = vsel %vm536, %v527, %v535
        %539 = vst [vmem:[%s325] sm:$0xf] %v537
        %v540 = vld [vmem:[#allocation3] sm:$0x3]
        %v541 = vld [vmem:[#allocation3 + $0x2] sm:$0x3]
        %v542 = vld [vmem:[#allocation3 + $0x4] sm:$0x3]
        %v543 = vld [vmem:[#allocation3 + $0x6] sm:$0x3]
        %v544 = vsel %vm378, %v540, 0.0
        %v545 = vrot.slane %v544, 4
        %v546 = vadd.f32 %v544, %v545
        %v547 = vrot.slane %v546, 2
        %v548 = vadd.f32 %v546, %v547
        %v549 = vrot.slane %v548, 1
        %v550 = vadd.f32 %v548, %v549
        %v551 = vsel %vm378, %v541, 0.0
        %v552 = vrot.slane %v551, 4
        %v553 = vadd.f32 %v551, %v552
        %v554 = vrot.slane %v553, 2
        %v555 = vadd.f32 %v553, %v554
        %v556 = vrot.slane %v555, 1
        %v557 = vadd.f32 %v555, %v556
        %v558 = vsel %vm378, %v542, 0.0
        %v559 = vrot.slane %v558, 4
        %v560 = vadd.f32 %v558, %v559
        %v561 = vrot.slane %v560, 2
        %v562 = vadd.f32 %v560, %v561
        %v563 = vrot.slane %v562, 1
        %v564 = vadd.f32 %v562, %v563
        %v565 = vsel %vm378, %v543, 0.0
        %v566 = vrot.slane %v565, 4
        %v567 = vadd.f32 %v565, %v566
        %v568 = vrot.slane %v567, 2
        %v569 = vadd.f32 %v567, %v568
        %v570 = vrot.slane %v569, 1
        %v571 = vadd.f32 %v569, %v570
        %v576 = vsel %vm532, %v557, %v550
        %v577 = vsel %vm534, %v564, %v576
        %v578 = vsel %vm536, %v571, %v577
        %580 = vst [vmem:[%s331] sm:$0xf] %v578
        %v581 = vld [vmem:[#allocation4] sm:$0x3]
        %v582 = vld [vmem:[#allocation4 + $0x2] sm:$0x3]
        %v583 = vld [vmem:[#allocation4 + $0x4] sm:$0x3]
        %v584 = vld [vmem:[#allocation4 + $0x6] sm:$0x3]
        %v585 = vsel %vm378, %v581, 0.0
        %v586 = vrot.slane %v585, 4
        %v587 = vadd.f32 %v585, %v586
        %v588 = vrot.slane %v587, 2
        %v589 = vadd.f32 %v587, %v588
        %v590 = vrot.slane %v589, 1
        %v591 = vadd.f32 %v589, %v590
        %v592 = vsel %vm378, %v582, 0.0
        %v593 = vrot.slane %v592, 4
        %v594 = vadd.f32 %v592, %v593
        %v595 = vrot.slane %v594, 2
        %v596 = vadd.f32 %v594, %v595
        %v597 = vrot.slane %v596, 1
        %v598 = vadd.f32 %v596, %v597
        %v599 = vsel %vm378, %v583, 0.0
        %v600 = vrot.slane %v599, 4
        %v601 = vadd.f32 %v599, %v600
        %v602 = vrot.slane %v601, 2
        %v603 = vadd.f32 %v601, %v602
        %v604 = vrot.slane %v603, 1
        %v605 = vadd.f32 %v603, %v604
        %v606 = vsel %vm378, %v584, 0.0
        %v607 = vrot.slane %v606, 4
        %v608 = vadd.f32 %v606, %v607
        %v609 = vrot.slane %v608, 2
        %v610 = vadd.f32 %v608, %v609
        %v611 = vrot.slane %v610, 1
        %v612 = vadd.f32 %v610, %v611
        %v617 = vsel %vm532, %v598, %v591
        %v618 = vsel %vm534, %v605, %v617
        %v619 = vsel %vm536, %v612, %v618
        %621 = vst [vmem:[%s337] sm:$0xf] %v619
        %v622 = vld [vmem:[#allocation5] sm:$0x3]
        %v623 = vsel %vm378, %v622, 0.0
        %v624 = vrot.slane %v623, 4
        %v625 = vadd.f32 %v623, %v624
        %v626 = vrot.slane %v625, 2
        %v627 = vadd.f32 %v625, %v626
        %v628 = vrot.slane %v627, 1
        %v629 = vadd.f32 %v627, %v628
        %630 = vst [vmem:[%s342] sm:$0x1] %v629
      $region36: #{dc_and_poly1ce_loss.1} parent=27 // pred_fallthru
        _
      %s631 = sadd.s32 %s22, %s23
      %p632 = scmp.lt.s32.totalorder %s631, 1
      %s633 = scalar_select %p632, %s631, 1
      %s634 = smul.addr %s633, 4
      %s635 = scalar_lea.vmem %s2, %s634
      %s636 = sadd.s32 %s22, %s23
      %p637 = scmp.lt.s32.totalorder %s636, 1
      %s638 = scalar_select %p637, %s636, 1
      %s639 = smul.addr %s638, 4
      %s640 = scalar_lea.vmem %s3, %s639
      %s641 = sadd.s32 %s22, %s23
      %p642 = scmp.lt.s32.totalorder %s641, 1
      %s643 = scalar_select %p642, %s641, 1
      %s644 = smul.addr %s643, 4
      %s645 = scalar_lea.vmem %s4, %s644
      %s646 = sadd.s32 %s22, %s23
      %p647 = scmp.lt.s32.totalorder %s646, 1
      %s648 = scalar_select %p647, %s646, 1
      %s649 = scalar_lea.vmem %s5, %s648
      // Predicated region
      $region37: #{dc_and_poly1ce_loss.1} parent=27 // pred_check
        %p650 = pneg %p116
      $region38: #{dc_and_poly1ce_loss.1} parent=27 // pred_check_branch
        %652 = sbr.rel (%p650) target = $region40
      $region39: #{dc_and_poly1ce_loss.1} parent=27 // pred_region
        %s653 = sadd.s32 %s22, %s23
      $region40: #{dc_and_poly1ce_loss.1} parent=27 // pred_fallthru
        _
      // Predicated region
      $region41: #{dc_and_poly1ce_loss.1} parent=27 // pred_check
        %p654 = pneg %p144
      $region42: #{dc_and_poly1ce_loss.1} parent=27 // pred_check_branch
        %656 = sbr.rel (%p654) target = $region44
      $region43: #{dc_and_poly1ce_loss.1} parent=27 // pred_region
        %s657 = sadd.s32 %s22, %s23
      $region44: #{dc_and_poly1ce_loss.1} parent=27 // pred_fallthru
        _
      // Predicated region
      $region45: #{dc_and_poly1ce_loss.1} parent=27 // pred_check
        %p658 = pneg %p172
      $region46: #{dc_and_poly1ce_loss.1} parent=27 // pred_check_branch
        %660 = sbr.rel (%p658) target = $region48
      $region47: #{dc_and_poly1ce_loss.1} parent=27 // pred_region
        %s661 = sadd.s32 %s22, %s23
      $region48: #{dc_and_poly1ce_loss.1} parent=27 // pred_fallthru
        _
      // Predicated region
      $region49: #{dc_and_poly1ce_loss.1} parent=27 // pred_check
        %p662 = pneg %p200
      $region50: #{dc_and_poly1ce_loss.1} parent=27 // pred_check_branch
        %664 = sbr.rel (%p662) target = $region52
      $region51: #{dc_and_poly1ce_loss.1} parent=27 // pred_region
        %s665 = sadd.s32 %s22, %s23
      $region52: #{dc_and_poly1ce_loss.1} parent=27 // pred_fallthru
        _
    $region28: #{dc_and_poly1ce_loss.1} parent=5 // pred_fallthru
      _
    %p666 = scmp.le.s32.totalorder 2, %s12
    // Predicated region
    $region53: #{dc_and_poly1ce_loss.1} parent=5 // pred_check
      %p667 = pneg %p666
    $region54: #{dc_and_poly1ce_loss.1} parent=5 // pred_check_branch
      %669 = sbr.rel (%p667) target = $region56
    $region55: #{dc_and_poly1ce_loss.1} parent=5 // pred_region
      %s670 = ssub.s32 %s12, 2
      // Predicated region
      $region57: #{dc_and_poly1ce_loss.1} parent=55 // pred_check
        %p671 = pneg %p122
      $region58: #{dc_and_poly1ce_loss.1} parent=55 // pred_check_branch
        %673 = sbr.rel (%p671) target = $region60
      $region59: #{dc_and_poly1ce_loss.1} parent=55 // pred_region
        %s674 = sadd.s32 %s25, %s26
        %p675 = scmp.lt.s32.totalorder %s674, 1
        %s676 = scalar_select %p675, %s674, 1
        %s677 = smul.addr %s676, 4
        %s678 = scalar_lea.vmem %s2, %s677
      $region60: #{dc_and_poly1ce_loss.1} parent=55 // pred_fallthru
        _
      // Predicated region
      $region61: #{dc_and_poly1ce_loss.1} parent=55 // pred_check
        %p679 = pneg %p150
      $region62: #{dc_and_poly1ce_loss.1} parent=55 // pred_check_branch
        %681 = sbr.rel (%p679) target = $region64
      $region63: #{dc_and_poly1ce_loss.1} parent=55 // pred_region
        %s682 = sadd.s32 %s25, %s26
        %p683 = scmp.lt.s32.totalorder %s682, 1
        %s684 = scalar_select %p683, %s682, 1
        %s685 = smul.addr %s684, 4
        %s686 = scalar_lea.vmem %s3, %s685
      $region64: #{dc_and_poly1ce_loss.1} parent=55 // pred_fallthru
        _
      // Predicated region
      $region65: #{dc_and_poly1ce_loss.1} parent=55 // pred_check
        %p687 = pneg %p178
      $region66: #{dc_and_poly1ce_loss.1} parent=55 // pred_check_branch
        %689 = sbr.rel (%p687) target = $region68
      $region67: #{dc_and_poly1ce_loss.1} parent=55 // pred_region
        %s690 = sadd.s32 %s25, %s26
        %p691 = scmp.lt.s32.totalorder %s690, 1
        %s692 = scalar_select %p691, %s690, 1
        %s693 = smul.addr %s692, 4
        %s694 = scalar_lea.vmem %s4, %s693
      $region68: #{dc_and_poly1ce_loss.1} parent=55 // pred_fallthru
        _
      // Predicated region
      $region69: #{dc_and_poly1ce_loss.1} parent=55 // pred_check
        %p695 = pneg %p206
      $region70: #{dc_and_poly1ce_loss.1} parent=55 // pred_check_branch
        %697 = sbr.rel (%p695) target = $region72
      $region71: #{dc_and_poly1ce_loss.1} parent=55 // pred_region
        %s698 = sadd.s32 %s25, %s26
        %p699 = scmp.lt.s32.totalorder %s698, 1
        %s700 = scalar_select %p699, %s698, 1
        %s701 = scalar_lea.vmem %s5, %s700
      $region72: #{dc_and_poly1ce_loss.1} parent=55 // pred_fallthru
        _
    $region56: #{dc_and_poly1ce_loss.1} parent=5 // pred_fallthru
      _
  $region6: #{dc_and_poly1ce_loss.1} parent=0 // loop_footer
    %s16 = sadd.s32 1, %s12
  $region7: #{dc_and_poly1ce_loss.1} parent=0 // loop_footer_branch
    %11 = sbr.rel target = $region3
  $region8: #{dc_and_poly1ce_loss.1} parent=0 // loop_exit
    _

</llo_original>
